<compile_context>
chip_gen: v6e
topology: v6e:2x2x1
jax: 0.10.0
libtpu: 0.0.40
codegen_flags: <defaults>
</compile_context>

<pallas_src>
import functools

import jax
import jax.numpy as jnp
from jax import lax
from jax.experimental import pallas as pl
from jax.experimental.pallas import tpu as pltpu


def _bidir_rnn_kernel(xp_ref, wih_ref, b_ref, whh_ref,
                      out_ref, hf_ref,
                      h_ref, xw_ref):
    """Fused bidirectional tanh-RNN recurrence over one time chunk.

    xp_ref  : (TS, B, 2D)  packed raw inputs: [:, :, :D] = X at forward time
              c*TS+s, [:, :, D:] = X at original time T-1-(c*TS+s) (reversed
              stream, flip done once in the wrapper / chunk index is just c).
    wih_ref : (2D, 2H) block-diagonal [W_ih_l 0; 0 W_ih_r]
    b_ref   : (1, 2H)  [b_l | b_r]
    whh_ref : (2H, 2H) block-diagonal [W_hh_l 0; 0 W_hh_r]
    out_ref : (TS, B, 2H) packed hidden states; left half in forward-time
              order, right half in reversed-time (recurrence) order.
    hf_ref  : (B, 2H) final packed hidden state (both directions).
    h_ref   : VMEM scratch (B, 2H), state carried across time chunks.
    xw_ref  : VMEM scratch (TS, B, 2H), per-chunk projected inputs.
    """
    ts, batch, d2 = xp_ref.shape
    h2 = whh_ref.shape[0]

    @pl.when(pl.program_id(0) == 0)
    def _():
        h_ref[...] = jnp.zeros_like(h_ref)

    # --- Chunk-level input projection: ONE MXU matmul covers both directions.
    xp = xp_ref[...].reshape(ts * batch, d2)
    xw = jnp.dot(xp, wih_ref[...], preferred_element_type=jnp.float32) + b_ref[...]
    xw_ref[...] = xw.reshape(ts, batch, h2)

    whh = whh_ref[...]

    # --- Latency-bound recurrence: one matmul + one tanh + one dense store/step.
    def step(s, h):
        h = jnp.tanh(xw_ref[s] +
                     jnp.dot(h, whh, preferred_element_type=jnp.float32))
        out_ref[s] = h.astype(out_ref.dtype)
        return h

    h = lax.fori_loop(0, ts, step, h_ref[...], unroll=min(ts, 8))
    h_ref[...] = h

    @pl.when(pl.program_id(0) == pl.num_programs(0) - 1)
    def _():
        hf_ref[...] = h.astype(hf_ref.dtype)


def _pick_time_chunk(T, B, D, H, budget_bytes=2 * 1024 * 1024):
    """Largest divisor of T whose per-chunk VMEM footprint fits the budget."""
    bytes_per_step = 4 * (2 * (B * 2 * D)      # packed X block, double-buffered
                          + 2 * (B * 2 * H)    # packed out block, double-buffered
                          + (B * 2 * H))       # xw scratch
    ts = max(1, budget_bytes // max(bytes_per_step, 1))
    ts = int(min(ts, T))
    while T % ts:
        ts -= 1
    return ts


def bidirectional_forward(X, params_l, params_r, H_Cs=None, *, time_chunk=None):
    """Mirror of Bidirectional.forward for a single-layer tanh RNN cell.

    X : (B, T, D_in) batch-major input (PyTorch (N, L, C) convention).
    params_* : (W_ih (D,H), W_hh (H,H), b (1,H)) for the left / right RNNs.
    Returns (outputs (B, T, 2H), (h_final_l, None), (h_final_r, None)).
    """
    # TODO(synk): initial hidden states H_Cs are ignored (zero-init), matching
    # the default-None path of the reference module.
    del H_Cs
    B, T, D = X.shape
    w_ih_l, w_hh_l, b_l = params_l
    w_ih_r, w_hh_r, b_r = params_r
    H = w_ih_l.shape[1]
    H2 = 2 * H
    D2 = 2 * D
    f32 = jnp.float32

    if time_chunk is None:
        time_chunk = _pick_time_chunk(T, B, D, H)
    assert T % time_chunk == 0, "time_chunk must divide T"
    num_chunks = T // time_chunk

    # --- Pack forward / reversed input streams along the lane dim (one fused
    # XLA layout pass over X: transpose + flip + concat). The kernel never
    # sees a (T,B,2H) HBM intermediate.
    X_t = jnp.transpose(X, (1, 0, 2)).astype(f32)            # (T, B, D)
    X_packed = jnp.concatenate([X_t, X_t[::-1]], axis=-1)    # (T, B, 2D)

    # Block-diagonal weights so each step is one matmul on a 2H-wide state.
    z_dh = jnp.zeros((D, H), f32)
    wih_bd = jnp.concatenate(
        [jnp.concatenate([w_ih_l.astype(f32), z_dh], axis=1),
         jnp.concatenate([z_dh, w_ih_r.astype(f32)], axis=1)], axis=0)   # (2D, 2H)
    z_hh = jnp.zeros((H, H), f32)
    whh_bd = jnp.concatenate(
        [jnp.concatenate([w_hh_l.astype(f32), z_hh], axis=1),
         jnp.concatenate([z_hh, w_hh_r.astype(f32)], axis=1)], axis=0)   # (2H, 2H)
    b_cat = jnp.concatenate([b_l, b_r], axis=-1).astype(f32)             # (1, 2H)

    # Explicit VMEM budget (generation-aware: stays well under v7x 64 MiB and
    # v5e's 16 MiB default scoped limit is overridden here).
    est = 4 * (2 * time_chunk * B * D2        # input blocks, double-buffered
               + 2 * time_chunk * B * H2      # output blocks, double-buffered
               + time_chunk * B * H2          # xw scratch
               + B * H2                       # hidden-state scratch
               + 2 * (D2 * H2 + H2 + H2 * H2))  # weights / bias
    vmem_limit = int(min(max(4 * est, 8 * 1024 * 1024), 64 * 1024 * 1024))

    grid_spec = pltpu.PrefetchScalarGridSpec(
        num_scalar_prefetch=0,
        grid=(num_chunks,),
        in_specs=[
            pl.BlockSpec((time_chunk, B, D2), lambda c: (c, 0, 0)),  # packed X chunk
            # Constant-index weights stay VMEM-resident across the grid.
            # (Could be single-buffered via pipeline_mode=pl.Buffered(1) for
            #  large H; left at default for compile robustness.)
            pl.BlockSpec((D2, H2), lambda c: (0, 0)),
            pl.BlockSpec((1, H2), lambda c: (0, 0)),
            pl.BlockSpec((H2, H2), lambda c: (0, 0)),
        ],
        out_specs=[
            pl.BlockSpec((time_chunk, B, H2), lambda c: (c, 0, 0)),  # packed outputs
            pl.BlockSpec((B, H2), lambda c: (0, 0)),                 # final states
        ],
        scratch_shapes=[
            pltpu.VMEM((B, H2), jnp.float32),                  # carried hidden state
            pltpu.VMEM((time_chunk, B, H2), jnp.float32),      # projected inputs
        ],
    )

    out_packed, hf = pl.pallas_call(
        _bidir_rnn_kernel,
        out_shape=(
            jax.ShapeDtypeStruct((T, B, H2), jnp.float32),
            jax.ShapeDtypeStruct((B, H2), jnp.float32),
        ),
        grid_spec=grid_spec,
        compiler_params=pltpu.CompilerParams(
            dimension_semantics=("arbitrary",),   # sequential recurrence over chunks
            vmem_limit_bytes=vmem_limit,
        ),
    )(X_packed, wih_bd, b_cat, whh_bd)

    # Left half is already in forward-time order; right half is in reversed
    # (recurrence) order, so the reference's outputs_r.flip(1) is folded into
    # the single layout pass that also returns to batch-major.
    out_l = out_packed[:, :, :H]           # (T, B, H)
    out_r = out_packed[::-1, :, H:]        # (T, B, H), back in original time order
    outputs = jnp.transpose(jnp.concatenate([out_l, out_r], axis=-1), (1, 0, 2))
    return outputs, (hf[:, :H], None), (hf[:, H:], None)


def make_params(key, d_in, hidden):
    k1, k2, k3 = jax.random.split(key, 3)
    scale = 1.0 / jnp.sqrt(hidden)
    w_ih = jax.random.uniform(k1, (d_in, hidden), jnp.float32, -scale, scale)
    w_hh = jax.random.uniform(k2, (hidden, hidden), jnp.float32, -scale, scale)
    b = jax.random.uniform(k3, (1, hidden), jnp.float32, -scale, scale)
    return w_ih, w_hh, b


def reference_forward(X, params_l, params_r):
    """Pure-JAX reference for correctness check."""
    def run(x_tm, w_ih, w_hh, b):
        def step(h, x):
            h_new = jnp.tanh(x @ w_ih + h @ w_hh + b[0])
            return h_new, h_new
        h0 = jnp.zeros((x_tm.shape[1], w_ih.shape[1]), jnp.float32)
        _, outs = jax.lax.scan(step, h0, x_tm)
        return outs
    x_tm = jnp.transpose(X, (1, 0, 2))
    out_l = run(x_tm, *params_l)
    out_r = run(x_tm[::-1], *params_r)
    return jnp.transpose(jnp.concatenate([out_l, out_r[::-1]], axis=-1), (1, 0, 2))


if __name__ == "__main__":
    B, T, D_IN, HIDDEN = 2, 8, 16, 32

    key = jax.random.PRNGKey(0)
    kx, kl, kr = jax.random.split(key, 3)

    X = jax.random.normal(kx, (B, T, D_IN), jnp.float32)
    params_l = make_params(kl, D_IN, HIDDEN)     # "RNNLayerL"
    params_r = make_params(kr, D_IN, HIDDEN)     # "RNNLayerR" (deepcopy -> independent)

    ref = reference_forward(X, params_l, params_r)

    # Default (auto-chosen) time chunk.
    fwd = jax.jit(bidirectional_forward)
    outputs, H_C_l, H_C_r = fwd(X, params_l, params_r)
    outputs = jax.block_until_ready(outputs)

    assert outputs.shape == (B, T, 2 * HIDDEN), outputs.shape
    assert jnp.allclose(outputs, ref, atol=1e-4, rtol=1e-4), "outputs mismatch vs. reference"
    assert jnp.allclose(H_C_l[0], ref[:, -1, :HIDDEN], atol=1e-4, rtol=1e-4)
    assert jnp.allclose(H_C_r[0], ref[:, 0, HIDDEN:], atol=1e-4, rtol=1e-4)

    # Multi-chunk path (exercises the carried hidden state across grid steps).
    fwd_chunked = jax.jit(functools.partial(bidirectional_forward, time_chunk=2))
    outputs_c, H_C_l_c, H_C_r_c = fwd_chunked(X, params_l, params_r)
    outputs_c = jax.block_until_ready(outputs_c)

    assert jnp.allclose(outputs_c, ref, atol=1e-4, rtol=1e-4), "chunked outputs mismatch"
    assert jnp.allclose(H_C_l_c[0], ref[:, -1, :HIDDEN], atol=1e-4, rtol=1e-4)
    assert jnp.allclose(H_C_r_c[0], ref[:, 0, HIDDEN:], atol=1e-4, rtol=1e-4)

    print("KERNEL_OK")
</pallas_src>

<mosaic_0001>
module attributes {stable_mosaic.version = 11 : i64} {
  func.func @_bidir_rnn_kernel(%arg0: i32, %arg1: memref<8x2x32xf32, #tpu.memory_space<vmem>>, %arg2: memref<32x64xf32, #tpu.memory_space<vmem>>, %arg3: memref<1x64xf32, #tpu.memory_space<vmem>>, %arg4: memref<64x64xf32, #tpu.memory_space<vmem>>, %arg5: memref<8x2x64xf32, #tpu.memory_space<vmem>>, %arg6: memref<2x64xf32, #tpu.memory_space<vmem>>, %arg7: memref<2x64xf32, #tpu.memory_space<vmem>>, %arg8: memref<8x2x64xf32, #tpu.memory_space<vmem>>) attributes {dimension_semantics = [#tpu.dimension_semantics<arbitrary>], iteration_bounds = array<i64: 1>, scalar_prefetch = 0 : i64, scratch_operands = 2 : i64, tpu.core_type = #tpu.core_type<tc>, window_params = [{transform_indices = @transform_0, window_bounds = array<i64: 8, 2, 32>}, {pipeline_mode = #tpu.pipeline_mode<synchronous>, transform_indices = @transform_1, window_bounds = array<i64: 32, 64>}, {pipeline_mode = #tpu.pipeline_mode<synchronous>, transform_indices = @transform_2, window_bounds = array<i64: 1, 64>}, {pipeline_mode = #tpu.pipeline_mode<synchronous>, transform_indices = @transform_3, window_bounds = array<i64: 64, 64>}, {transform_indices = @transform_4, window_bounds = array<i64: 8, 2, 64>}, {pipeline_mode = #tpu.pipeline_mode<synchronous>, transform_indices = @transform_5, window_bounds = array<i64: 2, 64>}]} {
    %c0_i32 = arith.constant 0 : i32
    %0 = arith.cmpi eq, %arg0, %c0_i32 : i32
    %1 = arith.extui %0 : i1 to i32
    %c0_i32_0 = arith.constant 0 : i32
    %2 = arith.cmpi ne, %1, %c0_i32_0 : i32
    scf.if %2 {
      %cst_59 = arith.constant 0.000000e+00 : f32
      %98 = vector.broadcast %cst_59 : f32 to vector<2x64xf32>
      %c0_60 = arith.constant 0 : index
      %c0_61 = arith.constant 0 : index
      %99 = vector.load %arg7[%c0_60, %c0_61] : memref<2x64xf32, #tpu.memory_space<vmem>>, vector<2x64xf32>
      tpu.vector_store %arg7[%c0_60, %c0_61], %98 {strides = array<i32>} : memref<2x64xf32, #tpu.memory_space<vmem>>, vector<2x64xf32>,
    } else {
    }
    %c0 = arith.constant 0 : index
    %c0_1 = arith.constant 0 : index
    %c0_2 = arith.constant 0 : index
    %3 = vector.load %arg1[%c0, %c0_1, %c0_2] : memref<8x2x32xf32, #tpu.memory_space<vmem>>, vector<8x2x32xf32>
    %4 = vector.shape_cast %3 : vector<8x2x32xf32> to vector<16x32xf32>
    %c0_3 = arith.constant 0 : index
    %c0_4 = arith.constant 0 : index
    %5 = vector.load %arg2[%c0_3, %c0_4] : memref<32x64xf32, #tpu.memory_space<vmem>>, vector<32x64xf32>
    %cst = arith.constant dense<0.000000e+00> : vector<16x64xf32>
    %6 = tpu.matmul %4, %5, %cst {dimension_numbers = #tpu.dot_dimension_numbers<[1], [0], [0], [1], [0, 0, 1, 1], [], []>} : vector<16x32xf32>, vector<32x64xf32>, vector<16x64xf32> -> vector<16x64xf32>
    %c0_5 = arith.constant 0 : index
    %c0_6 = arith.constant 0 : index
    %7 = vector.load %arg3[%c0_5, %c0_6] : memref<1x64xf32, #tpu.memory_space<vmem>>, vector<1x64xf32>
    %8 = vector.broadcast %7 : vector<1x64xf32> to vector<16x64xf32>
    %9 = arith.addf %6, %8 : vector<16x64xf32>
    %10 = vector.shape_cast %9 : vector<16x64xf32> to vector<8x2x64xf32>
    %c0_7 = arith.constant 0 : index
    %c0_8 = arith.constant 0 : index
    %c0_9 = arith.constant 0 : index
    %11 = vector.load %arg8[%c0_7, %c0_8, %c0_9] : memref<8x2x64xf32, #tpu.memory_space<vmem>>, vector<8x2x64xf32>
    tpu.vector_store %arg8[%c0_7, %c0_8, %c0_9], %10 {strides = array<i32>} : memref<8x2x64xf32, #tpu.memory_space<vmem>>, vector<8x2x64xf32>,
    %c0_10 = arith.constant 0 : index
    %c0_11 = arith.constant 0 : index
    %12 = vector.load %arg4[%c0_10, %c0_11] : memref<64x64xf32, #tpu.memory_space<vmem>>, vector<64x64xf32>
    %c0_12 = arith.constant 0 : index
    %c0_13 = arith.constant 0 : index
    %13 = vector.load %arg7[%c0_12, %c0_13] : memref<2x64xf32, #tpu.memory_space<vmem>>, vector<2x64xf32>
    %c0_i32_14 = arith.constant 0 : i32
    %14 = arith.index_cast %c0_i32_14 : i32 to index
    %c0_15 = arith.constant 0 : index
    %c0_16 = arith.constant 0 : index
    %15 = vector.load %arg8[%14, %c0_15, %c0_16] : memref<8x2x64xf32, #tpu.memory_space<vmem>>, vector<1x2x64xf32>
    %16 = vector.shape_cast %15 : vector<1x2x64xf32> to vector<2x64xf32>
    %cst_17 = arith.constant dense<0.000000e+00> : vector<2x64xf32>
    %17 = tpu.matmul %13, %12, %cst_17 {dimension_numbers = #tpu.dot_dimension_numbers<[1], [0], [0], [1], [0, 0, 1, 1], [], []>} : vector<2x64xf32>, vector<64x64xf32>, vector<2x64xf32> -> vector<2x64xf32>
    %18 = arith.addf %16, %17 : vector<2x64xf32>
    %19 = math.tanh %18 : vector<2x64xf32>
    %20 = arith.index_cast %c0_i32_14 : i32 to index
    %c0_18 = arith.constant 0 : index
    %c0_19 = arith.constant 0 : index
    %21 = vector.load %arg5[%20, %c0_18, %c0_19] : memref<8x2x64xf32, #tpu.memory_space<vmem>>, vector<1x2x64xf32>
    %22 = vector.shape_cast %21 : vector<1x2x64xf32> to vector<2x64xf32>
    %23 = vector.shape_cast %19 : vector<2x64xf32> to vector<1x2x64xf32>
    tpu.vector_store %arg5[%20, %c0_18, %c0_19], %23 {strides = array<i32>} : memref<8x2x64xf32, #tpu.memory_space<vmem>>, vector<1x2x64xf32>,
    %c1_i32 = arith.constant 1 : i32
    %24 = arith.index_cast %c1_i32 : i32 to index
    %c0_20 = arith.constant 0 : index
    %c0_21 = arith.constant 0 : index
    %25 = vector.load %arg8[%24, %c0_20, %c0_21] : memref<8x2x64xf32, #tpu.memory_space<vmem>>, vector<1x2x64xf32>
    %26 = vector.shape_cast %25 : vector<1x2x64xf32> to vector<2x64xf32>
    %cst_22 = arith.constant dense<0.000000e+00> : vector<2x64xf32>
    %27 = tpu.matmul %19, %12, %cst_22 {dimension_numbers = #tpu.dot_dimension_numbers<[1], [0], [0], [1], [0, 0, 1, 1], [], []>} : vector<2x64xf32>, vector<64x64xf32>, vector<2x64xf32> -> vector<2x64xf32>
    %28 = arith.addf %26, %27 : vector<2x64xf32>
    %29 = math.tanh %28 : vector<2x64xf32>
    %30 = arith.index_cast %c1_i32 : i32 to index
    %c0_23 = arith.constant 0 : index
    %c0_24 = arith.constant 0 : index
    %31 = vector.load %arg5[%30, %c0_23, %c0_24] : memref<8x2x64xf32, #tpu.memory_space<vmem>>, vector<1x2x64xf32>
    %32 = vector.shape_cast %31 : vector<1x2x64xf32> to vector<2x64xf32>
    %33 = vector.shape_cast %29 : vector<2x64xf32> to vector<1x2x64xf32>
    tpu.vector_store %arg5[%30, %c0_23, %c0_24], %33 {strides = array<i32>} : memref<8x2x64xf32, #tpu.memory_space<vmem>>, vector<1x2x64xf32>,
    %c2_i32 = arith.constant 2 : i32
    %34 = arith.index_cast %c2_i32 : i32 to index
    %c0_25 = arith.constant 0 : index
    %c0_26 = arith.constant 0 : index
    %35 = vector.load %arg8[%34, %c0_25, %c0_26] : memref<8x2x64xf32, #tpu.memory_space<vmem>>, vector<1x2x64xf32>
    %36 = vector.shape_cast %35 : vector<1x2x64xf32> to vector<2x64xf32>
    %cst_27 = arith.constant dense<0.000000e+00> : vector<2x64xf32>
    %37 = tpu.matmul %29, %12, %cst_27 {dimension_numbers = #tpu.dot_dimension_numbers<[1], [0], [0], [1], [0, 0, 1, 1], [], []>} : vector<2x64xf32>, vector<64x64xf32>, vector<2x64xf32> -> vector<2x64xf32>
    %38 = arith.addf %36, %37 : vector<2x64xf32>
    %39 = math.tanh %38 : vector<2x64xf32>
    %40 = arith.index_cast %c2_i32 : i32 to index
    %c0_28 = arith.constant 0 : index
    %c0_29 = arith.constant 0 : index
    %41 = vector.load %arg5[%40, %c0_28, %c0_29] : memref<8x2x64xf32, #tpu.memory_space<vmem>>, vector<1x2x64xf32>
    %42 = vector.shape_cast %41 : vector<1x2x64xf32> to vector<2x64xf32>
    %43 = vector.shape_cast %39 : vector<2x64xf32> to vector<1x2x64xf32>
    tpu.vector_store %arg5[%40, %c0_28, %c0_29], %43 {strides = array<i32>} : memref<8x2x64xf32, #tpu.memory_space<vmem>>, vector<1x2x64xf32>,
    %c3_i32 = arith.constant 3 : i32
    %44 = arith.index_cast %c3_i32 : i32 to index
    %c0_30 = arith.constant 0 : index
    %c0_31 = arith.constant 0 : index
    %45 = vector.load %arg8[%44, %c0_30, %c0_31] : memref<8x2x64xf32, #tpu.memory_space<vmem>>, vector<1x2x64xf32>
    %46 = vector.shape_cast %45 : vector<1x2x64xf32> to vector<2x64xf32>
    %cst_32 = arith.constant dense<0.000000e+00> : vector<2x64xf32>
    %47 = tpu.matmul %39, %12, %cst_32 {dimension_numbers = #tpu.dot_dimension_numbers<[1], [0], [0], [1], [0, 0, 1, 1], [], []>} : vector<2x64xf32>, vector<64x64xf32>, vector<2x64xf32> -> vector<2x64xf32>
    %48 = arith.addf %46, %47 : vector<2x64xf32>
    %49 = math.tanh %48 : vector<2x64xf32>
    %50 = arith.index_cast %c3_i32 : i32 to index
    %c0_33 = arith.constant 0 : index
    %c0_34 = arith.constant 0 : index
    %51 = vector.load %arg5[%50, %c0_33, %c0_34] : memref<8x2x64xf32, #tpu.memory_space<vmem>>, vector<1x2x64xf32>
    %52 = vector.shape_cast %51 : vector<1x2x64xf32> to vector<2x64xf32>
    %53 = vector.shape_cast %49 : vector<2x64xf32> to vector<1x2x64xf32>
    tpu.vector_store %arg5[%50, %c0_33, %c0_34], %53 {strides = array<i32>} : memref<8x2x64xf32, #tpu.memory_space<vmem>>, vector<1x2x64xf32>,
    %c4_i32 = arith.constant 4 : i32
    %54 = arith.index_cast %c4_i32 : i32 to index
    %c0_35 = arith.constant 0 : index
    %c0_36 = arith.constant 0 : index
    %55 = vector.load %arg8[%54, %c0_35, %c0_36] : memref<8x2x64xf32, #tpu.memory_space<vmem>>, vector<1x2x64xf32>
    %56 = vector.shape_cast %55 : vector<1x2x64xf32> to vector<2x64xf32>
    %cst_37 = arith.constant dense<0.000000e+00> : vector<2x64xf32>
    %57 = tpu.matmul %49, %12, %cst_37 {dimension_numbers = #tpu.dot_dimension_numbers<[1], [0], [0], [1], [0, 0, 1, 1], [], []>} : vector<2x64xf32>, vector<64x64xf32>, vector<2x64xf32> -> vector<2x64xf32>
    %58 = arith.addf %56, %57 : vector<2x64xf32>
    %59 = math.tanh %58 : vector<2x64xf32>
    %60 = arith.index_cast %c4_i32 : i32 to index
    %c0_38 = arith.constant 0 : index
    %c0_39 = arith.constant 0 : index
    %61 = vector.load %arg5[%60, %c0_38, %c0_39] : memref<8x2x64xf32, #tpu.memory_space<vmem>>, vector<1x2x64xf32>
    %62 = vector.shape_cast %61 : vector<1x2x64xf32> to vector<2x64xf32>
    %63 = vector.shape_cast %59 : vector<2x64xf32> to vector<1x2x64xf32>
    tpu.vector_store %arg5[%60, %c0_38, %c0_39], %63 {strides = array<i32>} : memref<8x2x64xf32, #tpu.memory_space<vmem>>, vector<1x2x64xf32>,
    %c5_i32 = arith.constant 5 : i32
    %64 = arith.index_cast %c5_i32 : i32 to index
    %c0_40 = arith.constant 0 : index
    %c0_41 = arith.constant 0 : index
    %65 = vector.load %arg8[%64, %c0_40, %c0_41] : memref<8x2x64xf32, #tpu.memory_space<vmem>>, vector<1x2x64xf32>
    %66 = vector.shape_cast %65 : vector<1x2x64xf32> to vector<2x64xf32>
    %cst_42 = arith.constant dense<0.000000e+00> : vector<2x64xf32>
    %67 = tpu.matmul %59, %12, %cst_42 {dimension_numbers = #tpu.dot_dimension_numbers<[1], [0], [0], [1], [0, 0, 1, 1], [], []>} : vector<2x64xf32>, vector<64x64xf32>, vector<2x64xf32> -> vector<2x64xf32>
    %68 = arith.addf %66, %67 : vector<2x64xf32>
    %69 = math.tanh %68 : vector<2x64xf32>
    %70 = arith.index_cast %c5_i32 : i32 to index
    %c0_43 = arith.constant 0 : index
    %c0_44 = arith.constant 0 : index
    %71 = vector.load %arg5[%70, %c0_43, %c0_44] : memref<8x2x64xf32, #tpu.memory_space<vmem>>, vector<1x2x64xf32>
    %72 = vector.shape_cast %71 : vector<1x2x64xf32> to vector<2x64xf32>
    %73 = vector.shape_cast %69 : vector<2x64xf32> to vector<1x2x64xf32>
    tpu.vector_store %arg5[%70, %c0_43, %c0_44], %73 {strides = array<i32>} : memref<8x2x64xf32, #tpu.memory_space<vmem>>, vector<1x2x64xf32>,
    %c6_i32 = arith.constant 6 : i32
    %74 = arith.index_cast %c6_i32 : i32 to index
    %c0_45 = arith.constant 0 : index
    %c0_46 = arith.constant 0 : index
    %75 = vector.load %arg8[%74, %c0_45, %c0_46] : memref<8x2x64xf32, #tpu.memory_space<vmem>>, vector<1x2x64xf32>
    %76 = vector.shape_cast %75 : vector<1x2x64xf32> to vector<2x64xf32>
    %cst_47 = arith.constant dense<0.000000e+00> : vector<2x64xf32>
    %77 = tpu.matmul %69, %12, %cst_47 {dimension_numbers = #tpu.dot_dimension_numbers<[1], [0], [0], [1], [0, 0, 1, 1], [], []>} : vector<2x64xf32>, vector<64x64xf32>, vector<2x64xf32> -> vector<2x64xf32>
    %78 = arith.addf %76, %77 : vector<2x64xf32>
    %79 = math.tanh %78 : vector<2x64xf32>
    %80 = arith.index_cast %c6_i32 : i32 to index
    %c0_48 = arith.constant 0 : index
    %c0_49 = arith.constant 0 : index
    %81 = vector.load %arg5[%80, %c0_48, %c0_49] : memref<8x2x64xf32, #tpu.memory_space<vmem>>, vector<1x2x64xf32>
    %82 = vector.shape_cast %81 : vector<1x2x64xf32> to vector<2x64xf32>
    %83 = vector.shape_cast %79 : vector<2x64xf32> to vector<1x2x64xf32>
    tpu.vector_store %arg5[%80, %c0_48, %c0_49], %83 {strides = array<i32>} : memref<8x2x64xf32, #tpu.memory_space<vmem>>, vector<1x2x64xf32>,
    %c7_i32 = arith.constant 7 : i32
    %84 = arith.index_cast %c7_i32 : i32 to index
    %c0_50 = arith.constant 0 : index
    %c0_51 = arith.constant 0 : index
    %85 = vector.load %arg8[%84, %c0_50, %c0_51] : memref<8x2x64xf32, #tpu.memory_space<vmem>>, vector<1x2x64xf32>
    %86 = vector.shape_cast %85 : vector<1x2x64xf32> to vector<2x64xf32>
    %cst_52 = arith.constant dense<0.000000e+00> : vector<2x64xf32>
    %87 = tpu.matmul %79, %12, %cst_52 {dimension_numbers = #tpu.dot_dimension_numbers<[1], [0], [0], [1], [0, 0, 1, 1], [], []>} : vector<2x64xf32>, vector<64x64xf32>, vector<2x64xf32> -> vector<2x64xf32>
    %88 = arith.addf %86, %87 : vector<2x64xf32>
    %89 = math.tanh %88 : vector<2x64xf32>
    %90 = arith.index_cast %c7_i32 : i32 to index
    %c0_53 = arith.constant 0 : index
    %c0_54 = arith.constant 0 : index
    %91 = vector.load %arg5[%90, %c0_53, %c0_54] : memref<8x2x64xf32, #tpu.memory_space<vmem>>, vector<1x2x64xf32>
    %92 = vector.shape_cast %91 : vector<1x2x64xf32> to vector<2x64xf32>
    %93 = vector.shape_cast %89 : vector<2x64xf32> to vector<1x2x64xf32>
    tpu.vector_store %arg5[%90, %c0_53, %c0_54], %93 {strides = array<i32>} : memref<8x2x64xf32, #tpu.memory_space<vmem>>, vector<1x2x64xf32>,
    %c8_i32 = arith.constant 8 : i32
    %c0_55 = arith.constant 0 : index
    %c0_56 = arith.constant 0 : index
    %94 = vector.load %arg7[%c0_55, %c0_56] : memref<2x64xf32, #tpu.memory_space<vmem>>, vector<2x64xf32>
    tpu.vector_store %arg7[%c0_55, %c0_56], %89 {strides = array<i32>} : memref<2x64xf32, #tpu.memory_space<vmem>>, vector<2x64xf32>,
    %c0_i32_57 = arith.constant 0 : i32
    %95 = arith.cmpi eq, %arg0, %c0_i32_57 : i32
    %96 = arith.extui %95 : i1 to i32
    %c0_i32_58 = arith.constant 0 : i32
    %97 = arith.cmpi ne, %96, %c0_i32_58 : i32
    scf.if %97 {
      %c0_59 = arith.constant 0 : index
      %c0_60 = arith.constant 0 : index
      %98 = vector.load %arg6[%c0_59, %c0_60] : memref<2x64xf32, #tpu.memory_space<vmem>>, vector<2x64xf32>
      tpu.vector_store %arg6[%c0_59, %c0_60], %89 {strides = array<i32>} : memref<2x64xf32, #tpu.memory_space<vmem>>, vector<2x64xf32>,
    } else {
    }
    return
  }
  func.func @transform_0(%arg0: i32) -> (i32, i32, i32) {
    %c0_i32 = arith.constant 0 : i32
    %c0_i32_0 = arith.constant 0 : i32
    %c0_i32_1 = arith.constant 0 : i32
    return %arg0, %c0_i32, %c0_i32_0 : i32, i32, i32
  }
  func.func @transform_1(%arg0: i32) -> (i32, i32) {
    %c0_i32 = arith.constant 0 : i32
    %c0_i32_0 = arith.constant 0 : i32
    %c0_i32_1 = arith.constant 0 : i32
    return %c0_i32, %c0_i32_0 : i32, i32
  }
  func.func @transform_2(%arg0: i32) -> (i32, i32) {
    %c0_i32 = arith.constant 0 : i32
    %c0_i32_0 = arith.constant 0 : i32
    %c0_i32_1 = arith.constant 0 : i32
    return %c0_i32, %c0_i32_0 : i32, i32
  }
  func.func @transform_3(%arg0: i32) -> (i32, i32) {
    %c0_i32 = arith.constant 0 : i32
    %c0_i32_0 = arith.constant 0 : i32
    %c0_i32_1 = arith.constant 0 : i32
    return %c0_i32, %c0_i32_0 : i32, i32
  }
  func.func @transform_4(%arg0: i32) -> (i32, i32, i32) {
    %c0_i32 = arith.constant 0 : i32
    %c0_i32_0 = arith.constant 0 : i32
    %c0_i32_1 = arith.constant 0 : i32
    return %arg0, %c0_i32, %c0_i32_0 : i32, i32, i32
  }
  func.func @transform_5(%arg0: i32) -> (i32, i32) {
    %c0_i32 = arith.constant 0 : i32
    %c0_i32_0 = arith.constant 0 : i32
    %c0_i32_1 = arith.constant 0 : i32
    return %c0_i32, %c0_i32_0 : i32, i32
  }
}

</mosaic_0001>

<llo_original>
// kernel: bidirectional_forward.1
$region0: #{bidirectional_forward.1}
  #allocation0 [shape = 'u32[]', space=smem, size = 0x4, offset = 0x4, fixed_abs, tag = 'smem constant byte address 0x4 - core index']
  #allocation1 [shape = 'u32[144,128]{1,0:T(1,128)}', space=vmem, size = 0x12000, scoped, tag = 'internal scratch']
  #allocation2 [shape = 'f32[2,64]{1,0:T(2,128)}', space=vmem, size = 0x400, scoped, tag = 'scratch operand']
  #allocation3 [shape = 'f32[8,2,64]{2,1,0:T(2,128)}', space=vmem, size = 0x2000, scoped, tag = 'scratch operand']
  %s0 = inlined_call_operand.vmem [shape: f32[8,2,32], index: 0, kind: input, shape index: {}]
  %s1 = inlined_call_operand.vmem [shape: f32[32,64], index: 1, kind: input, shape index: {}]
  %s2 = inlined_call_operand.vmem [shape: f32[1,64], index: 2, kind: input, shape index: {}]
  %s3 = inlined_call_operand.vmem [shape: f32[64,64], index: 3, kind: input, shape index: {}]
  %s4 = inlined_call_operand.vmem [shape: f32[8,2,64], index: 4, kind: output, shape index: {0}]
  %s5 = inlined_call_operand.vmem [shape: f32[2,64], index: 5, kind: output, shape index: {1}]
  %6 = xla_tuple %s4, %s5
  %s7 = sld [smem:[#allocation0]]
  $region42: #{bidirectional_forward.1} parent=0
    _
  %s9 = ssub.s32 1, %s7
  %s10 = scalar_select 0, %s9, %s7
  // Predicated region
  $region2: #{bidirectional_forward.1} parent=0 // pred_check
    _
  $region3: #{bidirectional_forward.1} parent=0 // pred_check_branch
    %12 = sbr.rel (0) target = $region5
  $region4: #{bidirectional_forward.1} parent=0 // pred_region
    _
  $region5: #{bidirectional_forward.1} parent=0 // pred_fallthru
    _
  // Predicated region
  $region6: #{bidirectional_forward.1} parent=0 // pred_check
    _
  $region7: #{bidirectional_forward.1} parent=0 // pred_check_branch
    %14 = sbr.rel (0) target = $region9
  $region8: #{bidirectional_forward.1} parent=0 // pred_region
    _
  $region9: #{bidirectional_forward.1} parent=0 // pred_fallthru
    _
  // Predicated region
  $region10: #{bidirectional_forward.1} parent=0 // pred_check
    _
  $region11: #{bidirectional_forward.1} parent=0 // pred_check_branch
    %16 = sbr.rel (0) target = $region13
  $region12: #{bidirectional_forward.1} parent=0 // pred_region
    _
  $region13: #{bidirectional_forward.1} parent=0 // pred_fallthru
    _
  // Predicated region
  $region14: #{bidirectional_forward.1} parent=0 // pred_check
    _
  $region15: #{bidirectional_forward.1} parent=0 // pred_check_branch
    %18 = sbr.rel (0) target = $region17
  $region16: #{bidirectional_forward.1} parent=0 // pred_region
    _
  $region17: #{bidirectional_forward.1} parent=0 // pred_fallthru
    _
  %p19 = scmp.eq.s32.totalorder 0, 0
  // Predicated region
  $region18: #{bidirectional_forward.1} parent=0 // pred_check
    %p20 = pneg %p19
  $region19: #{bidirectional_forward.1} parent=0 // pred_check_branch
    %22 = sbr.rel (%p20) target = $region21
  $region20: #{bidirectional_forward.1} parent=0 // pred_region
    %vm23 = vcmask 517120
    %24 = vst.msk [vmem:[#allocation2] sm:$0x3] %vm23, 0.0
  $region21: #{bidirectional_forward.1} parent=0 // pred_fallthru
    _
  %v25 = vld [vmem:[%s0] sm:$0x3]
  %v26 = vld [vmem:[%s0 + $0x2] sm:$0x3]
  %v27 = vld [vmem:[%s0 + $0x4] sm:$0x3]
  %v28 = vld [vmem:[%s0 + $0x6] sm:$0x3]
  %v29 = vld [vmem:[%s0 + $0x8] sm:$0x3]
  %v30 = vld [vmem:[%s0 + $0xa] sm:$0x3]
  %v31 = vld [vmem:[%s0 + $0xc] sm:$0x3]
  %v32 = vld [vmem:[%s0 + $0xe] sm:$0x3]
  %v33 = vld [vmem:[%s1] sm:$0xff]
  %v34 = vld [vmem:[%s1 + $0x8] sm:$0xff]
  %v35 = vld [vmem:[%s1 + $0x10] sm:$0xff]
  %v36 = vld [vmem:[%s1 + $0x18] sm:$0xff]
  %v37 = vld [vmem:[%s2] sm:$0x1]
  %v39 = vlaneseq
  %v40 = vshrl.u32 %v39, 7
  %v41 = vsub.s32 0, %v40
  %v42 = vrot.slane %v37, %v41
  %v52 = vcombine.low %v25, %v26
  %v53 = vcombine.low %v27, %v28
  %v55 = vunpack.c.l.s4 1983009808
  %v56 = vunpack.c.0.s8 %v55
  %v57 = vlaneseq
  %v58 = vshrl.u32 %v57, 7
  %v59 = vsub.s32 %v56, %v58
  %v60 = vrot.slane %v52, %v59
  %v62 = vunpack.c.l.s4 1983009808
  %v63 = vunpack.c.0.s8 %v62
  %v64 = vlaneseq
  %v65 = vshrl.u32 %v64, 7
  %v66 = vsub.s32 %v63, %v65
  %v67 = vrot.slane %v53, %v66
  %v68 = vcombine.low %v60, %v67
  %v69 = vcombine.low %v29, %v30
  %v70 = vcombine.low %v31, %v32
  %v72 = vunpack.c.l.s4 1983009808
  %v73 = vunpack.c.0.s8 %v72
  %v74 = vlaneseq
  %v75 = vshrl.u32 %v74, 7
  %v76 = vsub.s32 %v73, %v75
  %v77 = vrot.slane %v69, %v76
  %v79 = vunpack.c.l.s4 1983009808
  %v80 = vunpack.c.0.s8 %v79
  %v81 = vlaneseq
  %v82 = vshrl.u32 %v81, 7
  %v83 = vsub.s32 %v80, %v82
  %v84 = vrot.slane %v70, %v83
  %v85 = vcombine.low %v77, %v84
  %vm86 = vcmask 261120
  %v87 = vsel %vm86, %v68, 0
  %v89 = vsel %vm86, %v85, 0
  %91 = vmatprep.subr.mxu0 0.0
  %92 = vmatpush1.msra.mxu0 0.0
  %93 = vmatprep.subr.mxu0 0.0
  %94 = vmatpush1.msra.mxu0 0.0
  %95 = vmatprep.subr.mxu0 0.0
  %96 = vmatpush1.msra.mxu0 0.0
  %97 = vmatprep.subr.mxu0 0.0
  %98 = vmatpush1.msra.mxu0 0.0
  %99 = vmatprep.subr.mxu0 0.0
  %100 = vmatpush1.msra.mxu0 0.0
  %101 = vmatprep.subr.mxu0 0.0
  %102 = vmatpush1.msra.mxu0 0.0
  %103 = vmatprep.subr.mxu0 0.0
  %104 = vmatpush1.msra.mxu0 0.0
  %105 = vmatprep.subr.mxu0 0.0
  %106 = vmatpush1.msra.mxu0 0.0
  %107 = vmatprep.subr.mxu0 0.0
  %108 = vmatpush1.msra.mxu0 0.0
  %109 = vmatprep.subr.mxu0 0.0
  %110 = vmatpush1.msra.mxu0 0.0
  %111 = vmatprep.subr.mxu0 0.0
  %112 = vmatpush1.msra.mxu0 0.0
  %113 = vmatprep.subr.mxu0 0.0
  %114 = vmatpush1.msra.mxu0 0.0
  %115 = vmatprep.subr.mxu0 0.0
  %116 = vmatpush1.msra.mxu0 %v36
  %117 = vmatprep.subr.mxu0 0.0
  %118 = vmatpush1.msra.mxu0 %v35
  %119 = vmatprep.subr.mxu0 0.0
  %120 = vmatpush1.msra.mxu0 %v34
  %121 = vmatprep.subr.mxu0 0.0
  %122 = vmatpush1.msra.mxu0 %v33
  %123 = vmatprep.subr.mxu0 0.0
  %124 = vmatpush2.msra.mxu0 0.0
  %125 = vmatprep.subr.mxu0 0.0
  %126 = vmatpush2.msra.mxu0 0.0
  %127 = vmatprep.subr.mxu0 0.0
  %128 = vmatpush2.msra.mxu0 0.0
  %129 = vmatprep.subr.mxu0 0.0
  %130 = vmatpush2.msra.mxu0 0.0
  %131 = vmatprep.subr.mxu0 0.0
  %132 = vmatpush2.msra.mxu0 0.0
  %133 = vmatprep.subr.mxu0 0.0
  %134 = vmatpush2.msra.mxu0 0.0
  %135 = vmatprep.subr.mxu0 0.0
  %136 = vmatpush2.msra.mxu0 0.0
  %137 = vmatprep.subr.mxu0 0.0
  %138 = vmatpush2.msra.mxu0 0.0
  %139 = vmatprep.subr.mxu0 0.0
  %140 = vmatpush2.msra.mxu0 0.0
  %141 = vmatprep.subr.mxu0 0.0
  %142 = vmatpush2.msra.mxu0 0.0
  %143 = vmatprep.subr.mxu0 0.0
  %144 = vmatpush2.msra.mxu0 0.0
  %145 = vmatprep.subr.mxu0 0.0
  %146 = vmatpush2.msra.mxu0 0.0
  %147 = vmatprep.subr.mxu0 0.0
  %148 = vmatpush2.msra.mxu0 0.0
  %149 = vmatprep.subr.mxu0 0.0
  %150 = vmatpush2.msra.mxu0 0.0
  %151 = vmatprep.subr.mxu0 0.0
  %152 = vmatpush2.msra.mxu0 0.0
  %153 = vmatprep.subr.mxu0 0.0
  %154 = vmatpush2.msra.mxu0 0.0
  %155 = vmatprep.mubr.f32.mxu0 0.0
  %156 = vmatmul.mubr.f32.gmra.mxu0 %v87
  %v157 = vpop.f32.mrf.mxu0
  %v158 = vadd.f32 %v42, %v157
  %v159 = vpop.f32.mrf.mxu0
  %160 = vmatprep.mubr.f32.mxu0 0.0
  %161 = vmatmul.mubr.f32.gmra.mxu0 %v89
  %v162 = vpop.f32.mrf.mxu0
  %v163 = vadd.f32 %v42, %v162
  %v164 = vpop.f32.mrf.mxu0
  %165 = vdwg.mxu0
  %v168 = vcombine.high %v158, %v158
  %v170 = vunpack.c.l.s4 1983009808
  %v171 = vunpack.c.0.s8 %v170
  %v172 = vlaneseq
  %v173 = vshrl.u32 %v172, 7
  %v174 = vsub.s32 %v171, %v173
  %v175 = vrot.slane %v158, %v174
  %v177 = vunpack.c.l.s4 1983009808
  %v178 = vunpack.c.0.s8 %v177
  %v179 = vlaneseq
  %v180 = vshrl.u32 %v179, 7
  %v181 = vsub.s32 %v178, %v180
  %v182 = vrot.slane %v168, %v181
  %v183 = vcombine.high %v175, %v175
  %v184 = vcombine.high %v182, %v182
  %v185 = vcombine.high %v163, %v163
  %v187 = vunpack.c.l.s4 1983009808
  %v188 = vunpack.c.0.s8 %v187
  %v189 = vlaneseq
  %v190 = vshrl.u32 %v189, 7
  %v191 = vsub.s32 %v188, %v190
  %v192 = vrot.slane %v163, %v191
  %v194 = vunpack.c.l.s4 1983009808
  %v195 = vunpack.c.0.s8 %v194
  %v196 = vlaneseq
  %v197 = vshrl.u32 %v196, 7
  %v198 = vsub.s32 %v195, %v197
  %v199 = vrot.slane %v185, %v198
  %v200 = vcombine.high %v192, %v192
  %v201 = vcombine.high %v199, %v199
  %vm210 = vcmask 517120
  %211 = vst.msk [vmem:[#allocation3] sm:$0x3] %vm210, %v175
  %212 = vst.msk [vmem:[#allocation3 + $0x2] sm:$0x3] %vm210, %v183
  %213 = vst.msk [vmem:[#allocation3 + $0x4] sm:$0x3] %vm210, %v182
  %214 = vst.msk [vmem:[#allocation3 + $0x6] sm:$0x3] %vm210, %v184
  %215 = vst.msk [vmem:[#allocation3 + $0x8] sm:$0x3] %vm210, %v192
  %216 = vst.msk [vmem:[#allocation3 + $0xa] sm:$0x3] %vm210, %v200
  %217 = vst.msk [vmem:[#allocation3 + $0xc] sm:$0x3] %vm210, %v199
  %218 = vst.msk [vmem:[#allocation3 + $0xe] sm:$0x3] %vm210, %v201
  %v219 = vld [vmem:[%s3] sm:$0xff]
  %v220 = vld [vmem:[%s3 + $0x8] sm:$0xff]
  %v221 = vld [vmem:[%s3 + $0x10] sm:$0xff]
  %v222 = vld [vmem:[%s3 + $0x18] sm:$0xff]
  %v223 = vld [vmem:[%s3 + $0x20] sm:$0xff]
  %v224 = vld [vmem:[%s3 + $0x28] sm:$0xff]
  %v225 = vld [vmem:[%s3 + $0x30] sm:$0xff]
  %v226 = vld [vmem:[%s3 + $0x38] sm:$0xff]
  %v227 = vld [vmem:[#allocation2] sm:$0x3]
  %v228 = vld [vmem:[#allocation3] sm:$0x3]
  %vm229 = vcmask 523264
  %v231 = vsel %vm229, %v227, 0
  %233 = vmatprep.subr.mxu0 0.0
  %234 = vmatpush1.msra.mxu0 0.0
  %235 = vmatprep.subr.mxu0 0.0
  %236 = vmatpush1.msra.mxu0 0.0
  %237 = vmatprep.subr.mxu0 0.0
  %238 = vmatpush1.msra.mxu0 0.0
  %239 = vmatprep.subr.mxu0 0.0
  %240 = vmatpush1.msra.mxu0 0.0
  %241 = vmatprep.subr.mxu0 0.0
  %242 = vmatpush1.msra.mxu0 0.0
  %243 = vmatprep.subr.mxu0 0.0
  %244 = vmatpush1.msra.mxu0 0.0
  %245 = vmatprep.subr.mxu0 0.0
  %246 = vmatpush1.msra.mxu0 0.0
  %247 = vmatprep.subr.mxu0 0.0
  %248 = vmatpush1.msra.mxu0 0.0
  %249 = vmatprep.subr.mxu0 0.0
  %250 = vmatpush1.msra.mxu0 %v226
  %251 = vmatprep.subr.mxu0 0.0
  %252 = vmatpush1.msra.mxu0 %v225
  %253 = vmatprep.subr.mxu0 0.0
  %254 = vmatpush1.msra.mxu0 %v224
  %255 = vmatprep.subr.mxu0 0.0
  %256 = vmatpush1.msra.mxu0 %v223
  %257 = vmatprep.subr.mxu0 0.0
  %258 = vmatpush1.msra.mxu0 %v222
  %259 = vmatprep.subr.mxu0 0.0
  %260 = vmatpush1.msra.mxu0 %v221
  %261 = vmatprep.subr.mxu0 0.0
  %262 = vmatpush1.msra.mxu0 %v220
  %263 = vmatprep.subr.mxu0 0.0
  %264 = vmatpush1.msra.mxu0 %v219
  %265 = vmatprep.subr.mxu0 0.0
  %266 = vmatpush2.msra.mxu0 0.0
  %267 = vmatprep.subr.mxu0 0.0
  %268 = vmatpush2.msra.mxu0 0.0
  %269 = vmatprep.subr.mxu0 0.0
  %270 = vmatpush2.msra.mxu0 0.0
  %271 = vmatprep.subr.mxu0 0.0
  %272 = vmatpush2.msra.mxu0 0.0
  %273 = vmatprep.subr.mxu0 0.0
  %274 = vmatpush2.msra.mxu0 0.0
  %275 = vmatprep.subr.mxu0 0.0
  %276 = vmatpush2.msra.mxu0 0.0
  %277 = vmatprep.subr.mxu0 0.0
  %278 = vmatpush2.msra.mxu0 0.0
  %279 = vmatprep.subr.mxu0 0.0
  %280 = vmatpush2.msra.mxu0 0.0
  %281 = vmatprep.subr.mxu0 0.0
  %282 = vmatpush2.msra.mxu0 0.0
  %283 = vmatprep.subr.mxu0 0.0
  %284 = vmatpush2.msra.mxu0 0.0
  %285 = vmatprep.subr.mxu0 0.0
  %286 = vmatpush2.msra.mxu0 0.0
  %287 = vmatprep.subr.mxu0 0.0
  %288 = vmatpush2.msra.mxu0 0.0
  %289 = vmatprep.subr.mxu0 0.0
  %290 = vmatpush2.msra.mxu0 0.0
  %291 = vmatprep.subr.mxu0 0.0
  %292 = vmatpush2.msra.mxu0 0.0
  %293 = vmatprep.subr.mxu0 0.0
  %294 = vmatpush2.msra.mxu0 0.0
  %295 = vmatprep.subr.mxu0 0.0
  %296 = vmatpush2.msra.mxu0 0.0
  %297 = vmatprep.mubr.f32.mxu0 0.0
  %298 = vmatmul.mubr.f32.gmra.mxu0 %v231
  %v299 = vpop.f32.mrf.mxu0
  %v300 = vadd.f32 0.0, %v299
  %v301 = vpop.f32.mrf.mxu0
  %302 = vdwg.mxu0
  %v303 = vadd.f32 %v228, %v300
  %v304 = vtanh.pop %v303
  %305 = vst.msk [vmem:[%s4] sm:$0x3] %vm210, %v304
  %s306 = scalar_lea.vmem [#allocation3], 2
  %v307 = vld [vmem:[%s306] sm:$0x3]
  %v309 = vsel %vm229, %v304, 0
  %311 = vmatprep.subr.mxu0 0.0
  %312 = vmatpush1.msra.mxu0 0.0
  %313 = vmatprep.subr.mxu0 0.0
  %314 = vmatpush1.msra.mxu0 0.0
  %315 = vmatprep.subr.mxu0 0.0
  %316 = vmatpush1.msra.mxu0 0.0
  %317 = vmatprep.subr.mxu0 0.0
  %318 = vmatpush1.msra.mxu0 0.0
  %319 = vmatprep.subr.mxu0 0.0
  %320 = vmatpush1.msra.mxu0 0.0
  %321 = vmatprep.subr.mxu0 0.0
  %322 = vmatpush1.msra.mxu0 0.0
  %323 = vmatprep.subr.mxu0 0.0
  %324 = vmatpush1.msra.mxu0 0.0
  %325 = vmatprep.subr.mxu0 0.0
  %326 = vmatpush1.msra.mxu0 0.0
  %327 = vmatprep.subr.mxu0 0.0
  %328 = vmatpush1.msra.mxu0 %v226
  %329 = vmatprep.subr.mxu0 0.0
  %330 = vmatpush1.msra.mxu0 %v225
  %331 = vmatprep.subr.mxu0 0.0
  %332 = vmatpush1.msra.mxu0 %v224
  %333 = vmatprep.subr.mxu0 0.0
  %334 = vmatpush1.msra.mxu0 %v223
  %335 = vmatprep.subr.mxu0 0.0
  %336 = vmatpush1.msra.mxu0 %v222
  %337 = vmatprep.subr.mxu0 0.0
  %338 = vmatpush1.msra.mxu0 %v221
  %339 = vmatprep.subr.mxu0 0.0
  %340 = vmatpush1.msra.mxu0 %v220
  %341 = vmatprep.subr.mxu0 0.0
  %342 = vmatpush1.msra.mxu0 %v219
  %343 = vmatprep.subr.mxu0 0.0
  %344 = vmatpush2.msra.mxu0 0.0
  %345 = vmatprep.subr.mxu0 0.0
  %346 = vmatpush2.msra.mxu0 0.0
  %347 = vmatprep.subr.mxu0 0.0
  %348 = vmatpush2.msra.mxu0 0.0
  %349 = vmatprep.subr.mxu0 0.0
  %350 = vmatpush2.msra.mxu0 0.0
  %351 = vmatprep.subr.mxu0 0.0
  %352 = vmatpush2.msra.mxu0 0.0
  %353 = vmatprep.subr.mxu0 0.0
  %354 = vmatpush2.msra.mxu0 0.0
  %355 = vmatprep.subr.mxu0 0.0
  %356 = vmatpush2.msra.mxu0 0.0
  %357 = vmatprep.subr.mxu0 0.0
  %358 = vmatpush2.msra.mxu0 0.0
  %359 = vmatprep.subr.mxu0 0.0
  %360 = vmatpush2.msra.mxu0 0.0
  %361 = vmatprep.subr.mxu0 0.0
  %362 = vmatpush2.msra.mxu0 0.0
  %363 = vmatprep.subr.mxu0 0.0
  %364 = vmatpush2.msra.mxu0 0.0
  %365 = vmatprep.subr.mxu0 0.0
  %366 = vmatpush2.msra.mxu0 0.0
  %367 = vmatprep.subr.mxu0 0.0
  %368 = vmatpush2.msra.mxu0 0.0
  %369 = vmatprep.subr.mxu0 0.0
  %370 = vmatpush2.msra.mxu0 0.0
  %371 = vmatprep.subr.mxu0 0.0
  %372 = vmatpush2.msra.mxu0 0.0
  %373 = vmatprep.subr.mxu0 0.0
  %374 = vmatpush2.msra.mxu0 0.0
  %375 = vmatprep.mubr.f32.mxu0 0.0
  %376 = vmatmul.mubr.f32.gmra.mxu0 %v309
  %v377 = vpop.f32.mrf.mxu0
  %v378 = vadd.f32 0.0, %v377
  %v379 = vpop.f32.mrf.mxu0
  %380 = vdwg.mxu0
  %v381 = vadd.f32 %v307, %v378
  %v382 = vtanh.pop %v381
  %s383 = scalar_lea.vmem %s4, 2
  %384 = vst.msk [vmem:[%s383] sm:$0x3] %vm210, %v382
  %s385 = scalar_lea.vmem [#allocation3], 4
  %v386 = vld [vmem:[%s385] sm:$0x3]
  %v388 = vsel %vm229, %v382, 0
  %390 = vmatprep.subr.mxu0 0.0
  %391 = vmatpush1.msra.mxu0 0.0
  %392 = vmatprep.subr.mxu0 0.0
  %393 = vmatpush1.msra.mxu0 0.0
  %394 = vmatprep.subr.mxu0 0.0
  %395 = vmatpush1.msra.mxu0 0.0
  %396 = vmatprep.subr.mxu0 0.0
  %397 = vmatpush1.msra.mxu0 0.0
  %398 = vmatprep.subr.mxu0 0.0
  %399 = vmatpush1.msra.mxu0 0.0
  %400 = vmatprep.subr.mxu0 0.0
  %401 = vmatpush1.msra.mxu0 0.0
  %402 = vmatprep.subr.mxu0 0.0
  %403 = vmatpush1.msra.mxu0 0.0
  %404 = vmatprep.subr.mxu0 0.0
  %405 = vmatpush1.msra.mxu0 0.0
  %406 = vmatprep.subr.mxu0 0.0
  %407 = vmatpush1.msra.mxu0 %v226
  %408 = vmatprep.subr.mxu0 0.0
  %409 = vmatpush1.msra.mxu0 %v225
  %410 = vmatprep.subr.mxu0 0.0
  %411 = vmatpush1.msra.mxu0 %v224
  %412 = vmatprep.subr.mxu0 0.0
  %413 = vmatpush1.msra.mxu0 %v223
  %414 = vmatprep.subr.mxu0 0.0
  %415 = vmatpush1.msra.mxu0 %v222
  %416 = vmatprep.subr.mxu0 0.0
  %417 = vmatpush1.msra.mxu0 %v221
  %418 = vmatprep.subr.mxu0 0.0
  %419 = vmatpush1.msra.mxu0 %v220
  %420 = vmatprep.subr.mxu0 0.0
  %421 = vmatpush1.msra.mxu0 %v219
  %422 = vmatprep.subr.mxu0 0.0
  %423 = vmatpush2.msra.mxu0 0.0
  %424 = vmatprep.subr.mxu0 0.0
  %425 = vmatpush2.msra.mxu0 0.0
  %426 = vmatprep.subr.mxu0 0.0
  %427 = vmatpush2.msra.mxu0 0.0
  %428 = vmatprep.subr.mxu0 0.0
  %429 = vmatpush2.msra.mxu0 0.0
  %430 = vmatprep.subr.mxu0 0.0
  %431 = vmatpush2.msra.mxu0 0.0
  %432 = vmatprep.subr.mxu0 0.0
  %433 = vmatpush2.msra.mxu0 0.0
  %434 = vmatprep.subr.mxu0 0.0
  %435 = vmatpush2.msra.mxu0 0.0
  %436 = vmatprep.subr.mxu0 0.0
  %437 = vmatpush2.msra.mxu0 0.0
  %438 = vmatprep.subr.mxu0 0.0
  %439 = vmatpush2.msra.mxu0 0.0
  %440 = vmatprep.subr.mxu0 0.0
  %441 = vmatpush2.msra.mxu0 0.0
  %442 = vmatprep.subr.mxu0 0.0
  %443 = vmatpush2.msra.mxu0 0.0
  %444 = vmatprep.subr.mxu0 0.0
  %445 = vmatpush2.msra.mxu0 0.0
  %446 = vmatprep.subr.mxu0 0.0
  %447 = vmatpush2.msra.mxu0 0.0
  %448 = vmatprep.subr.mxu0 0.0
  %449 = vmatpush2.msra.mxu0 0.0
  %450 = vmatprep.subr.mxu0 0.0
  %451 = vmatpush2.msra.mxu0 0.0
  %452 = vmatprep.subr.mxu0 0.0
  %453 = vmatpush2.msra.mxu0 0.0
  %454 = vmatprep.mubr.f32.mxu0 0.0
  %455 = vmatmul.mubr.f32.gmra.mxu0 %v388
  %v456 = vpop.f32.mrf.mxu0
  %v457 = vadd.f32 0.0, %v456
  %v458 = vpop.f32.mrf.mxu0
  %459 = vdwg.mxu0
  %v460 = vadd.f32 %v386, %v457
  %v461 = vtanh.pop %v460
  %s462 = scalar_lea.vmem %s4, 4
  %463 = vst.msk [vmem:[%s462] sm:$0x3] %vm210, %v461
  %s464 = scalar_lea.vmem [#allocation3], 6
  %v465 = vld [vmem:[%s464] sm:$0x3]
  %v467 = vsel %vm229, %v461, 0
  %469 = vmatprep.subr.mxu0 0.0
  %470 = vmatpush1.msra.mxu0 0.0
  %471 = vmatprep.subr.mxu0 0.0
  %472 = vmatpush1.msra.mxu0 0.0
  %473 = vmatprep.subr.mxu0 0.0
  %474 = vmatpush1.msra.mxu0 0.0
  %475 = vmatprep.subr.mxu0 0.0
  %476 = vmatpush1.msra.mxu0 0.0
  %477 = vmatprep.subr.mxu0 0.0
  %478 = vmatpush1.msra.mxu0 0.0
  %479 = vmatprep.subr.mxu0 0.0
  %480 = vmatpush1.msra.mxu0 0.0
  %481 = vmatprep.subr.mxu0 0.0
  %482 = vmatpush1.msra.mxu0 0.0
  %483 = vmatprep.subr.mxu0 0.0
  %484 = vmatpush1.msra.mxu0 0.0
  %485 = vmatprep.subr.mxu0 0.0
  %486 = vmatpush1.msra.mxu0 %v226
  %487 = vmatprep.subr.mxu0 0.0
  %488 = vmatpush1.msra.mxu0 %v225
  %489 = vmatprep.subr.mxu0 0.0
  %490 = vmatpush1.msra.mxu0 %v224
  %491 = vmatprep.subr.mxu0 0.0
  %492 = vmatpush1.msra.mxu0 %v223
  %493 = vmatprep.subr.mxu0 0.0
  %494 = vmatpush1.msra.mxu0 %v222
  %495 = vmatprep.subr.mxu0 0.0
  %496 = vmatpush1.msra.mxu0 %v221
  %497 = vmatprep.subr.mxu0 0.0
  %498 = vmatpush1.msra.mxu0 %v220
  %499 = vmatprep.subr.mxu0 0.0
  %500 = vmatpush1.msra.mxu0 %v219
  %501 = vmatprep.subr.mxu0 0.0
  %502 = vmatpush2.msra.mxu0 0.0
  %503 = vmatprep.subr.mxu0 0.0
  %504 = vmatpush2.msra.mxu0 0.0
  %505 = vmatprep.subr.mxu0 0.0
  %506 = vmatpush2.msra.mxu0 0.0
  %507 = vmatprep.subr.mxu0 0.0
  %508 = vmatpush2.msra.mxu0 0.0
  %509 = vmatprep.subr.mxu0 0.0
  %510 = vmatpush2.msra.mxu0 0.0
  %511 = vmatprep.subr.mxu0 0.0
  %512 = vmatpush2.msra.mxu0 0.0
  %513 = vmatprep.subr.mxu0 0.0
  %514 = vmatpush2.msra.mxu0 0.0
  %515 = vmatprep.subr.mxu0 0.0
  %516 = vmatpush2.msra.mxu0 0.0
  %517 = vmatprep.subr.mxu0 0.0
  %518 = vmatpush2.msra.mxu0 0.0
  %519 = vmatprep.subr.mxu0 0.0
  %520 = vmatpush2.msra.mxu0 0.0
  %521 = vmatprep.subr.mxu0 0.0
  %522 = vmatpush2.msra.mxu0 0.0
  %523 = vmatprep.subr.mxu0 0.0
  %524 = vmatpush2.msra.mxu0 0.0
  %525 = vmatprep.subr.mxu0 0.0
  %526 = vmatpush2.msra.mxu0 0.0
  %527 = vmatprep.subr.mxu0 0.0
  %528 = vmatpush2.msra.mxu0 0.0
  %529 = vmatprep.subr.mxu0 0.0
  %530 = vmatpush2.msra.mxu0 0.0
  %531 = vmatprep.subr.mxu0 0.0
  %532 = vmatpush2.msra.mxu0 0.0
  %533 = vmatprep.mubr.f32.mxu0 0.0
  %534 = vmatmul.mubr.f32.gmra.mxu0 %v467
  %v535 = vpop.f32.mrf.mxu0
  %v536 = vadd.f32 0.0, %v535
  %v537 = vpop.f32.mrf.mxu0
  %538 = vdwg.mxu0
  %v539 = vadd.f32 %v465, %v536
  %v540 = vtanh.pop %v539
  %s541 = scalar_lea.vmem %s4, 6
  %542 = vst.msk [vmem:[%s541] sm:$0x3] %vm210, %v540
  %s543 = scalar_lea.vmem [#allocation3], 8
  %v544 = vld [vmem:[%s543] sm:$0x3]
  %v546 = vsel %vm229, %v540, 0
  %548 = vmatprep.subr.mxu0 0.0
  %549 = vmatpush1.msra.mxu0 0.0
  %550 = vmatprep.subr.mxu0 0.0
  %551 = vmatpush1.msra.mxu0 0.0
  %552 = vmatprep.subr.mxu0 0.0
  %553 = vmatpush1.msra.mxu0 0.0
  %554 = vmatprep.subr.mxu0 0.0
  %555 = vmatpush1.msra.mxu0 0.0
  %556 = vmatprep.subr.mxu0 0.0
  %557 = vmatpush1.msra.mxu0 0.0
  %558 = vmatprep.subr.mxu0 0.0
  %559 = vmatpush1.msra.mxu0 0.0
  %560 = vmatprep.subr.mxu0 0.0
  %561 = vmatpush1.msra.mxu0 0.0
  %562 = vmatprep.subr.mxu0 0.0
  %563 = vmatpush1.msra.mxu0 0.0
  %564 = vmatprep.subr.mxu0 0.0
  %565 = vmatpush1.msra.mxu0 %v226
  %566 = vmatprep.subr.mxu0 0.0
  %567 = vmatpush1.msra.mxu0 %v225
  %568 = vmatprep.subr.mxu0 0.0
  %569 = vmatpush1.msra.mxu0 %v224
  %570 = vmatprep.subr.mxu0 0.0
  %571 = vmatpush1.msra.mxu0 %v223
  %572 = vmatprep.subr.mxu0 0.0
  %573 = vmatpush1.msra.mxu0 %v222
  %574 = vmatprep.subr.mxu0 0.0
  %575 = vmatpush1.msra.mxu0 %v221
  %576 = vmatprep.subr.mxu0 0.0
  %577 = vmatpush1.msra.mxu0 %v220
  %578 = vmatprep.subr.mxu0 0.0
  %579 = vmatpush1.msra.mxu0 %v219
  %580 = vmatprep.subr.mxu0 0.0
  %581 = vmatpush2.msra.mxu0 0.0
  %582 = vmatprep.subr.mxu0 0.0
  %583 = vmatpush2.msra.mxu0 0.0
  %584 = vmatprep.subr.mxu0 0.0
  %585 = vmatpush2.msra.mxu0 0.0
  %586 = vmatprep.subr.mxu0 0.0
  %587 = vmatpush2.msra.mxu0 0.0
  %588 = vmatprep.subr.mxu0 0.0
  %589 = vmatpush2.msra.mxu0 0.0
  %590 = vmatprep.subr.mxu0 0.0
  %591 = vmatpush2.msra.mxu0 0.0
  %592 = vmatprep.subr.mxu0 0.0
  %593 = vmatpush2.msra.mxu0 0.0
  %594 = vmatprep.subr.mxu0 0.0
  %595 = vmatpush2.msra.mxu0 0.0
  %596 = vmatprep.subr.mxu0 0.0
  %597 = vmatpush2.msra.mxu0 0.0
  %598 = vmatprep.subr.mxu0 0.0
  %599 = vmatpush2.msra.mxu0 0.0
  %600 = vmatprep.subr.mxu0 0.0
  %601 = vmatpush2.msra.mxu0 0.0
  %602 = vmatprep.subr.mxu0 0.0
  %603 = vmatpush2.msra.mxu0 0.0
  %604 = vmatprep.subr.mxu0 0.0
  %605 = vmatpush2.msra.mxu0 0.0
  %606 = vmatprep.subr.mxu0 0.0
  %607 = vmatpush2.msra.mxu0 0.0
  %608 = vmatprep.subr.mxu0 0.0
  %609 = vmatpush2.msra.mxu0 0.0
  %610 = vmatprep.subr.mxu0 0.0
  %611 = vmatpush2.msra.mxu0 0.0
  %612 = vmatprep.mubr.f32.mxu0 0.0
  %613 = vmatmul.mubr.f32.gmra.mxu0 %v546
  %v614 = vpop.f32.mrf.mxu0
  %v615 = vadd.f32 0.0, %v614
  %v616 = vpop.f32.mrf.mxu0
  %617 = vdwg.mxu0
  %v618 = vadd.f32 %v544, %v615
  %v619 = vtanh.pop %v618
  %s620 = scalar_lea.vmem %s4, 8
  %621 = vst.msk [vmem:[%s620] sm:$0x3] %vm210, %v619
  %s622 = scalar_lea.vmem [#allocation3], 10
  %v623 = vld [vmem:[%s622] sm:$0x3]
  %v625 = vsel %vm229, %v619, 0
  %627 = vmatprep.subr.mxu0 0.0
  %628 = vmatpush1.msra.mxu0 0.0
  %629 = vmatprep.subr.mxu0 0.0
  %630 = vmatpush1.msra.mxu0 0.0
  %631 = vmatprep.subr.mxu0 0.0
  %632 = vmatpush1.msra.mxu0 0.0
  %633 = vmatprep.subr.mxu0 0.0
  %634 = vmatpush1.msra.mxu0 0.0
  %635 = vmatprep.subr.mxu0 0.0
  %636 = vmatpush1.msra.mxu0 0.0
  %637 = vmatprep.subr.mxu0 0.0
  %638 = vmatpush1.msra.mxu0 0.0
  %639 = vmatprep.subr.mxu0 0.0
  %640 = vmatpush1.msra.mxu0 0.0
  %641 = vmatprep.subr.mxu0 0.0
  %642 = vmatpush1.msra.mxu0 0.0
  %643 = vmatprep.subr.mxu0 0.0
  %644 = vmatpush1.msra.mxu0 %v226
  %645 = vmatprep.subr.mxu0 0.0
  %646 = vmatpush1.msra.mxu0 %v225
  %647 = vmatprep.subr.mxu0 0.0
  %648 = vmatpush1.msra.mxu0 %v224
  %649 = vmatprep.subr.mxu0 0.0
  %650 = vmatpush1.msra.mxu0 %v223
  %651 = vmatprep.subr.mxu0 0.0
  %652 = vmatpush1.msra.mxu0 %v222
  %653 = vmatprep.subr.mxu0 0.0
  %654 = vmatpush1.msra.mxu0 %v221
  %655 = vmatprep.subr.mxu0 0.0
  %656 = vmatpush1.msra.mxu0 %v220
  %657 = vmatprep.subr.mxu0 0.0
  %658 = vmatpush1.msra.mxu0 %v219
  %659 = vmatprep.subr.mxu0 0.0
  %660 = vmatpush2.msra.mxu0 0.0
  %661 = vmatprep.subr.mxu0 0.0
  %662 = vmatpush2.msra.mxu0 0.0
  %663 = vmatprep.subr.mxu0 0.0
  %664 = vmatpush2.msra.mxu0 0.0
  %665 = vmatprep.subr.mxu0 0.0
  %666 = vmatpush2.msra.mxu0 0.0
  %667 = vmatprep.subr.mxu0 0.0
  %668 = vmatpush2.msra.mxu0 0.0
  %669 = vmatprep.subr.mxu0 0.0
  %670 = vmatpush2.msra.mxu0 0.0
  %671 = vmatprep.subr.mxu0 0.0
  %672 = vmatpush2.msra.mxu0 0.0
  %673 = vmatprep.subr.mxu0 0.0
  %674 = vmatpush2.msra.mxu0 0.0
  %675 = vmatprep.subr.mxu0 0.0
  %676 = vmatpush2.msra.mxu0 0.0
  %677 = vmatprep.subr.mxu0 0.0
  %678 = vmatpush2.msra.mxu0 0.0
  %679 = vmatprep.subr.mxu0 0.0
  %680 = vmatpush2.msra.mxu0 0.0
  %681 = vmatprep.subr.mxu0 0.0
  %682 = vmatpush2.msra.mxu0 0.0
  %683 = vmatprep.subr.mxu0 0.0
  %684 = vmatpush2.msra.mxu0 0.0
  %685 = vmatprep.subr.mxu0 0.0
  %686 = vmatpush2.msra.mxu0 0.0
  %687 = vmatprep.subr.mxu0 0.0
  %688 = vmatpush2.msra.mxu0 0.0
  %689 = vmatprep.subr.mxu0 0.0
  %690 = vmatpush2.msra.mxu0 0.0
  %691 = vmatprep.mubr.f32.mxu0 0.0
  %692 = vmatmul.mubr.f32.gmra.mxu0 %v625
  %v693 = vpop.f32.mrf.mxu0
  %v694 = vadd.f32 0.0, %v693
  %v695 = vpop.f32.mrf.mxu0
  %696 = vdwg.mxu0
  %v697 = vadd.f32 %v623, %v694
  %v698 = vtanh.pop %v697
  %s699 = scalar_lea.vmem %s4, 10
  %700 = vst.msk [vmem:[%s699] sm:$0x3] %vm210, %v698
  %s701 = scalar_lea.vmem [#allocation3], 12
  %v702 = vld [vmem:[%s701] sm:$0x3]
  %v704 = vsel %vm229, %v698, 0
  %706 = vmatprep.subr.mxu0 0.0
  %707 = vmatpush1.msra.mxu0 0.0
  %708 = vmatprep.subr.mxu0 0.0
  %709 = vmatpush1.msra.mxu0 0.0
  %710 = vmatprep.subr.mxu0 0.0
  %711 = vmatpush1.msra.mxu0 0.0
  %712 = vmatprep.subr.mxu0 0.0
  %713 = vmatpush1.msra.mxu0 0.0
  %714 = vmatprep.subr.mxu0 0.0
  %715 = vmatpush1.msra.mxu0 0.0
  %716 = vmatprep.subr.mxu0 0.0
  %717 = vmatpush1.msra.mxu0 0.0
  %718 = vmatprep.subr.mxu0 0.0
  %719 = vmatpush1.msra.mxu0 0.0
  %720 = vmatprep.subr.mxu0 0.0
  %721 = vmatpush1.msra.mxu0 0.0
  %722 = vmatprep.subr.mxu0 0.0
  %723 = vmatpush1.msra.mxu0 %v226
  %724 = vmatprep.subr.mxu0 0.0
  %725 = vmatpush1.msra.mxu0 %v225
  %726 = vmatprep.subr.mxu0 0.0
  %727 = vmatpush1.msra.mxu0 %v224
  %728 = vmatprep.subr.mxu0 0.0
  %729 = vmatpush1.msra.mxu0 %v223
  %730 = vmatprep.subr.mxu0 0.0
  %731 = vmatpush1.msra.mxu0 %v222
  %732 = vmatprep.subr.mxu0 0.0
  %733 = vmatpush1.msra.mxu0 %v221
  %734 = vmatprep.subr.mxu0 0.0
  %735 = vmatpush1.msra.mxu0 %v220
  %736 = vmatprep.subr.mxu0 0.0
  %737 = vmatpush1.msra.mxu0 %v219
  %738 = vmatprep.subr.mxu0 0.0
  %739 = vmatpush2.msra.mxu0 0.0
  %740 = vmatprep.subr.mxu0 0.0
  %741 = vmatpush2.msra.mxu0 0.0
  %742 = vmatprep.subr.mxu0 0.0
  %743 = vmatpush2.msra.mxu0 0.0
  %744 = vmatprep.subr.mxu0 0.0
  %745 = vmatpush2.msra.mxu0 0.0
  %746 = vmatprep.subr.mxu0 0.0
  %747 = vmatpush2.msra.mxu0 0.0
  %748 = vmatprep.subr.mxu0 0.0
  %749 = vmatpush2.msra.mxu0 0.0
  %750 = vmatprep.subr.mxu0 0.0
  %751 = vmatpush2.msra.mxu0 0.0
  %752 = vmatprep.subr.mxu0 0.0
  %753 = vmatpush2.msra.mxu0 0.0
  %754 = vmatprep.subr.mxu0 0.0
  %755 = vmatpush2.msra.mxu0 0.0
  %756 = vmatprep.subr.mxu0 0.0
  %757 = vmatpush2.msra.mxu0 0.0
  %758 = vmatprep.subr.mxu0 0.0
  %759 = vmatpush2.msra.mxu0 0.0
  %760 = vmatprep.subr.mxu0 0.0
  %761 = vmatpush2.msra.mxu0 0.0
  %762 = vmatprep.subr.mxu0 0.0
  %763 = vmatpush2.msra.mxu0 0.0
  %764 = vmatprep.subr.mxu0 0.0
  %765 = vmatpush2.msra.mxu0 0.0
  %766 = vmatprep.subr.mxu0 0.0
  %767 = vmatpush2.msra.mxu0 0.0
  %768 = vmatprep.subr.mxu0 0.0
  %769 = vmatpush2.msra.mxu0 0.0
  %770 = vmatprep.mubr.f32.mxu0 0.0
  %771 = vmatmul.mubr.f32.gmra.mxu0 %v704
  %v772 = vpop.f32.mrf.mxu0
  %v773 = vadd.f32 0.0, %v772
  %v774 = vpop.f32.mrf.mxu0
  %775 = vdwg.mxu0
  %v776 = vadd.f32 %v702, %v773
  %v777 = vtanh.pop %v776
  %s778 = scalar_lea.vmem %s4, 12
  %779 = vst.msk [vmem:[%s778] sm:$0x3] %vm210, %v777
  %s780 = scalar_lea.vmem [#allocation3], 14
  %v781 = vld [vmem:[%s780] sm:$0x3]
  %v783 = vsel %vm229, %v777, 0
  %785 = vmatprep.subr.mxu0 0.0
  %786 = vmatpush1.msra.mxu0 0.0
  %787 = vmatprep.subr.mxu0 0.0
  %788 = vmatpush1.msra.mxu0 0.0
  %789 = vmatprep.subr.mxu0 0.0
  %790 = vmatpush1.msra.mxu0 0.0
  %791 = vmatprep.subr.mxu0 0.0
  %792 = vmatpush1.msra.mxu0 0.0
  %793 = vmatprep.subr.mxu0 0.0
  %794 = vmatpush1.msra.mxu0 0.0
  %795 = vmatprep.subr.mxu0 0.0
  %796 = vmatpush1.msra.mxu0 0.0
  %797 = vmatprep.subr.mxu0 0.0
  %798 = vmatpush1.msra.mxu0 0.0
  %799 = vmatprep.subr.mxu0 0.0
  %800 = vmatpush1.msra.mxu0 0.0
  %801 = vmatprep.subr.mxu0 0.0
  %802 = vmatpush1.msra.mxu0 %v226
  %803 = vmatprep.subr.mxu0 0.0
  %804 = vmatpush1.msra.mxu0 %v225
  %805 = vmatprep.subr.mxu0 0.0
  %806 = vmatpush1.msra.mxu0 %v224
  %807 = vmatprep.subr.mxu0 0.0
  %808 = vmatpush1.msra.mxu0 %v223
  %809 = vmatprep.subr.mxu0 0.0
  %810 = vmatpush1.msra.mxu0 %v222
  %811 = vmatprep.subr.mxu0 0.0
  %812 = vmatpush1.msra.mxu0 %v221
  %813 = vmatprep.subr.mxu0 0.0
  %814 = vmatpush1.msra.mxu0 %v220
  %815 = vmatprep.subr.mxu0 0.0
  %816 = vmatpush1.msra.mxu0 %v219
  %817 = vmatprep.subr.mxu0 0.0
  %818 = vmatpush2.msra.mxu0 0.0
  %819 = vmatprep.subr.mxu0 0.0
  %820 = vmatpush2.msra.mxu0 0.0
  %821 = vmatprep.subr.mxu0 0.0
  %822 = vmatpush2.msra.mxu0 0.0
  %823 = vmatprep.subr.mxu0 0.0
  %824 = vmatpush2.msra.mxu0 0.0
  %825 = vmatprep.subr.mxu0 0.0
  %826 = vmatpush2.msra.mxu0 0.0
  %827 = vmatprep.subr.mxu0 0.0
  %828 = vmatpush2.msra.mxu0 0.0
  %829 = vmatprep.subr.mxu0 0.0
  %830 = vmatpush2.msra.mxu0 0.0
  %831 = vmatprep.subr.mxu0 0.0
  %832 = vmatpush2.msra.mxu0 0.0
  %833 = vmatprep.subr.mxu0 0.0
  %834 = vmatpush2.msra.mxu0 0.0
  %835 = vmatprep.subr.mxu0 0.0
  %836 = vmatpush2.msra.mxu0 0.0
  %837 = vmatprep.subr.mxu0 0.0
  %838 = vmatpush2.msra.mxu0 0.0
  %839 = vmatprep.subr.mxu0 0.0
  %840 = vmatpush2.msra.mxu0 0.0
  %841 = vmatprep.subr.mxu0 0.0
  %842 = vmatpush2.msra.mxu0 0.0
  %843 = vmatprep.subr.mxu0 0.0
  %844 = vmatpush2.msra.mxu0 0.0
  %845 = vmatprep.subr.mxu0 0.0
  %846 = vmatpush2.msra.mxu0 0.0
  %847 = vmatprep.subr.mxu0 0.0
  %848 = vmatpush2.msra.mxu0 0.0
  %849 = vmatprep.mubr.f32.mxu0 0.0
  %850 = vmatmul.mubr.f32.gmra.mxu0 %v783
  %v851 = vpop.f32.mrf.mxu0
  %v852 = vadd.f32 0.0, %v851
  %v853 = vpop.f32.mrf.mxu0
  %854 = vdwg.mxu0
  %v855 = vadd.f32 %v781, %v852
  %v856 = vtanh.pop %v855
  %s857 = scalar_lea.vmem %s4, 14
  %858 = vst.msk [vmem:[%s857] sm:$0x3] %vm210, %v856
  %859 = vst.msk [vmem:[#allocation2] sm:$0x3] %vm210, %v856
  // Predicated region
  $region22: #{bidirectional_forward.1} parent=0 // pred_check
    %p860 = pneg %p19
  $region23: #{bidirectional_forward.1} parent=0 // pred_check_branch
    %862 = sbr.rel (%p860) target = $region25
  $region24: #{bidirectional_forward.1} parent=0 // pred_region
    %863 = vst.msk [vmem:[%s5] sm:$0x3] %vm210, %v856
  $region25: #{bidirectional_forward.1} parent=0 // pred_fallthru
    _
  // Predicated region
  $region26: #{bidirectional_forward.1} parent=0 // pred_check
    _
  $region27: #{bidirectional_forward.1} parent=0 // pred_check_branch
    %865 = sbr.rel (0) target = $region29
  $region28: #{bidirectional_forward.1} parent=0 // pred_region
    _
  $region29: #{bidirectional_forward.1} parent=0 // pred_fallthru
    _
  // Predicated region
  $region30: #{bidirectional_forward.1} parent=0 // pred_check
    _
  $region31: #{bidirectional_forward.1} parent=0 // pred_check_branch
    %867 = sbr.rel (0) target = $region33
  $region32: #{bidirectional_forward.1} parent=0 // pred_region
    _
  $region33: #{bidirectional_forward.1} parent=0 // pred_fallthru
    _
  // Predicated region
  $region34: #{bidirectional_forward.1} parent=0 // pred_check
    _
  $region35: #{bidirectional_forward.1} parent=0 // pred_check_branch
    %869 = sbr.rel (0) target = $region37
  $region36: #{bidirectional_forward.1} parent=0 // pred_region
    _
  $region37: #{bidirectional_forward.1} parent=0 // pred_fallthru
    _
  // Predicated region
  $region38: #{bidirectional_forward.1} parent=0 // pred_check
    _
  $region39: #{bidirectional_forward.1} parent=0 // pred_check_branch
    %871 = sbr.rel (0) target = $region41
  $region40: #{bidirectional_forward.1} parent=0 // pred_region
    _
  $region41: #{bidirectional_forward.1} parent=0 // pred_fallthru
    _

</llo_original>
